<compile_context>
chip_gen: v7x
topology: tpu7x:2x2x1
jax: 0.10.0
libtpu: 0.0.40
codegen_flags: <defaults>
</compile_context>

<pallas_src>
import functools

import jax
import jax.numpy as jnp
from jax.experimental import pallas as pl
from jax.experimental.pallas import tpu as pltpu


def _center_head_kernel(H, W, Cout, feat_ref, mask_ref, w1_ref, w2_ref, out_ref):
    # feat_ref : (Cpad, B*HW)        feature, channels zero-padded to Cpad, batch
    #                                folded on lanes (lane p = b*HW + y*W + x)
    # mask_ref : (1, B*HW)           1.0 where the heatmap is forced to zero
    # w1_ref   : (Chead, 9*Cpad+1)   3x3 conv weights, tap-major; last col = bias
    # w2_ref   : (Cout, Chead+1)     1x1 conv weights (transposed); last col = bias
    # out_ref  : (2*Cout, B*HW)      rows [0:Cout] = heat, rows [Cout:] = NMS'd heat
    f32 = jnp.float32
    N = feat_ref.shape[-1]                       # B * H * W (lane axis)

    # ---- row/column edge masks from a lane iota (no DMA, no scratch) ---------
    p = jax.lax.broadcasted_iota(jnp.int32, (1, N), 1)
    if W & (W - 1) == 0:
        col = p & (W - 1)
        rowlin = p >> (W.bit_length() - 1)
    else:  # TODO(synk): non-power-of-two W/H relies on Mosaic integer div/mod lowering.
        col = p % W
        rowlin = p // W
    row = (rowlin & (H - 1)) if H & (H - 1) == 0 else (rowlin % H)
    not_col0 = jnp.where(col != 0, 1.0, 0.0).astype(f32)        # 0 at left image edge
    not_collast = jnp.where(col != W - 1, 1.0, 0.0).astype(f32)  # 0 at right image edge
    not_row0 = jnp.where(row != 0, 1.0, 0.0).astype(f32)        # 0 at top image edge
    not_rowlast = jnp.where(row != H - 1, 1.0, 0.0).astype(f32)  # 0 at bottom image edge

    # ---- 3x3 conv (padding=1, bias) as ONE MXU matmul -------------------------
    # Tap (dy, dx) needs window[p] = x[p + dy*W + dx] with zero padding.  Each
    # tap is an XLU lane-roll of x by -(dy*W + dx); row-wrap / image-wrap lanes
    # are killed by the column masks (applied to the roll source, which also
    # covers the diagonal taps) and the row masks (applied to the rolled
    # destination).  The circular wrap of the batch-folded roll always lands in
    # a masked row/column, so images never leak into each other.
    x = feat_ref[...]                            # (Cpad, N)
    xp = x * not_col0                            # source for dx = +1 taps
    xm = x * not_collast                         # source for dx = -1 taps
    taps = []
    for dy in (-1, 0, 1):
        rmask = not_row0 if dy == -1 else (not_rowlast if dy == 1 else None)
        for dx in (-1, 0, 1):
            src = xp if dx == 1 else (xm if dx == -1 else x)
            s = dy * W + dx
            t = src if s == 0 else pltpu.roll(src, (-s) % N, axis=1)
            taps.append(t if rmask is None else t * rmask)
    ones_row = jnp.ones((1, N), f32)
    stack = jnp.concatenate(taps + [ones_row], axis=0)          # (9*Cpad + 1, N)

    hidden = jnp.dot(w1_ref[...], stack, preferred_element_type=f32)
    hidden = jnp.maximum(hidden, 0.0)                            # ReLU

    # ---- 1x1 conv (bias) + sigmoid (tanh form keeps the transcendental on EUP)
    logits = jnp.dot(w2_ref[...], jnp.concatenate([hidden, ones_row], axis=0),
                     preferred_element_type=f32)
    heat = 0.5 * jnp.tanh(0.5 * logits) + 0.5                    # (Cout, N) in [0, 1]

    # ---- masked_fill(value=0) --------------------------------------------------
    heat = jnp.where(mask_ref[...] > 0.5, 0.0, heat)

    # ---- 3x3 NMS: separable max via lane rolls + equality keep mask -----------
    # Zero padding is equivalent to torch's -inf padding because heat >= 0.
    left = pltpu.roll(heat, 1, axis=1) * not_col0                # value from x-1
    right = pltpu.roll(heat, N - 1, axis=1) * not_collast        # value from x+1
    colmax = jnp.maximum(heat, jnp.maximum(left, right))
    up = pltpu.roll(colmax, W, axis=1) * not_row0                # value from y-1
    down = pltpu.roll(colmax, N - W, axis=1) * not_rowlast       # value from y+1
    hmax = jnp.maximum(colmax, jnp.maximum(up, down))

    out_ref[0:Cout, :] = heat
    out_ref[Cout:2 * Cout, :] = jnp.where(hmax == heat, heat, 0.0)


def _pred_head_nms(feature_nchw, mask, w1, b1, w2, b2):
    """Conv3x3 + ReLU + Conv1x1 + sigmoid + masked_fill and 3x3 NMS, one Pallas call."""
    B, Cin, H, W = feature_nchw.shape
    Chead = w1.shape[-1]
    Cout = w2.shape[-1]
    HW = H * W
    N = B * HW
    Cpad = 8 * ((Cin + 7) // 8)                  # pad channels to a full sublane tile

    # NCHW -> (Cpad, B*HW): channels on sublanes, batch+space on lanes.
    # The transpose/pad are tiny (few-KB) XLA ops outside the kernel.
    x = jnp.transpose(feature_nchw.astype(jnp.float32), (1, 0, 2, 3)).reshape(Cin, N)
    x = jnp.pad(x, ((0, Cpad - Cin), (0, 0)))
    maskf = mask.reshape(1, N).astype(jnp.float32)

    # Weight layout: (Chead, 9*Cpad [+1 bias col]), tap-major row blocks (dy, dx).
    # Convention: w1[ky, kx, ci, co] multiplies input[ci, y + ky - 1, x + kx - 1]
    # (a real torch Conv2d checkpoint needs weight.permute(2, 3, 1, 0) into this).
    w1p = jnp.pad(w1.astype(jnp.float32), ((0, 0), (0, 0), (0, Cpad - Cin), (0, 0)))
    w1a = jnp.concatenate([w1p.reshape(9 * Cpad, Chead).T,
                           b1.reshape(Chead, 1).astype(jnp.float32)], axis=1)
    w2a = jnp.concatenate([w2.T.astype(jnp.float32),
                           b2.reshape(Cout, 1).astype(jnp.float32)], axis=1)

    kernel = functools.partial(_center_head_kernel, H, W, Cout)

    out = pl.pallas_call(
        kernel,
        out_shape=jax.ShapeDtypeStruct((2 * Cout, N), jnp.float32),
        grid=(1,),                               # single step: batch folded on lanes
        in_specs=[
            pl.BlockSpec((Cpad, N), lambda i: (0, 0)),
            pl.BlockSpec((1, N), lambda i: (0, 0)),
            pl.BlockSpec((Chead, 9 * Cpad + 1), lambda i: (0, 0)),
            pl.BlockSpec((Cout, Chead + 1), lambda i: (0, 0)),
        ],
        out_specs=pl.BlockSpec((2 * Cout, N), lambda i: (0, 0)),
        # NOTE(v7x): with 2 TensorCores one could keep a size-B "parallel" grid
        # axis instead; on single-TC v5e/v6e the folded single step wins.
        compiler_params=pltpu.CompilerParams(dimension_semantics=("arbitrary",)),
    )(x, maskf, w1a, w2a)

    heat_flat, nms_flat = out[:Cout], out[Cout:]
    heatmap = heat_flat.reshape(Cout, B, H, W).transpose(1, 0, 2, 3)   # (B, Cout, H, W)
    nms = nms_flat.reshape(Cout, B, HW).transpose(1, 0, 2)             # (B, Cout, HW)
    return heatmap, nms


def _topk_decode(nms_flat, W, top_K):
    """Exact two-stage top-k of CenterNet's _topk(); plain-JAX glue."""
    B, C, HW = nms_flat.shape
    topk_scores, topk_inds = jax.lax.top_k(nms_flat, top_K)             # (B, C, K)
    topk_ys = (topk_inds // W).astype(jnp.float32)
    topk_xs = (topk_inds % W).astype(jnp.float32)

    _, topk_ind = jax.lax.top_k(topk_scores.reshape(B, C * top_K), top_K)  # (B, K)
    gather = lambda f: jnp.take_along_axis(f.reshape(B, C * top_K), topk_ind, axis=1)
    xs = gather(topk_xs) + 0.5
    ys = gather(topk_ys) + 0.5
    return xs, ys


def center_generation_forward(feature, mask, valid_ratio, *, top_K,
                              out_height, out_width, params):
    """Mirror of CenterGeneration.forward.

    feature:     (B, num_channels, H, W) float32 (NCHW, like PyTorch)
    mask:        (B, H, W)               bool    (True => zero out heatmap)
    valid_ratio: (B, 2)                  [ratio_h, ratio_w]
    returns (heatmap [B, num_heatmap, H, W], refpoints [B, top_K, 2]).
    out_height / out_width are accepted but unused (dead code in the reference).
    """
    del out_height, out_width
    # TODO(synk): torch.cuda.synchronize() has no equivalent / is unnecessary in JAX.
    w1, b1, w2, b2 = params
    heatmap, nms_flat = _pred_head_nms(feature, mask, w1, b1, w2, b2)
    H, W = feature.shape[-2:]
    xs, ys = _topk_decode(nms_flat, W, top_K)
    ref_x = xs / (W * valid_ratio[:, 1][:, None])
    ref_y = ys / (H * valid_ratio[:, 0][:, None])
    refpoints = jnp.stack([ref_x, ref_y], axis=-1)
    return heatmap, refpoints


# ---------------------------- pure-JAX reference -------------------------------
def _reference_head(feature, mask, params):
    """pred_head + sigmoid + masked_fill via XLA ops (independent code path)."""
    w1, b1, w2, b2 = params
    h = jax.lax.conv_general_dilated(
        feature.astype(jnp.float32), w1.astype(jnp.float32), (1, 1), "SAME",
        dimension_numbers=("NCHW", "HWIO", "NCHW"),
        precision=jax.lax.Precision.HIGHEST)
    h = jnp.maximum(h + b1[None, :, None, None], 0.0)
    logits = jnp.einsum("bchw,cd->bdhw", h, w2.astype(jnp.float32),
                        precision=jax.lax.Precision.HIGHEST)
    logits = logits + b2[None, :, None, None]
    heat = jax.nn.sigmoid(logits)
    return jnp.where(mask[:, None, :, :], 0.0, heat)


def _reference_nms(heat):
    """3x3 NMS (max_pool2d stride 1 pad 1 + equality keep mask) via XLA."""
    hmax = jax.lax.reduce_window(heat, -jnp.inf, jax.lax.max,
                                 (1, 1, 3, 3), (1, 1, 1, 1),
                                 ((0, 0), (0, 0), (1, 1), (1, 1)))
    return jnp.where(hmax == heat, heat, 0.0)


if __name__ == "__main__":
    # args.num_channels=4, args.head_conv=8, args.num_heatmap=2
    B, Cin, Chead, Cout = 2, 4, 8, 2
    H = W = 16
    top_K = 8

    key = jax.random.PRNGKey(0)
    kw1, kb1, kw2, kb2, kf, km, kv = jax.random.split(key, 7)

    # Deterministic synthetic parameters (pred_head: Conv3x3 -> ReLU -> Conv1x1).
    w1 = jax.random.normal(kw1, (3, 3, Cin, Chead), jnp.float32) * 0.1
    b1 = jax.random.normal(kb1, (Chead,), jnp.float32) * 0.1
    w2 = jax.random.normal(kw2, (Chead, Cout), jnp.float32) * 0.1
    b2 = jax.random.normal(kb2, (Cout,), jnp.float32) * 0.1

    feature = jax.random.normal(kf, (B, Cin, H, W), jnp.float32)
    mask = jax.random.bernoulli(km, 0.3, (B, H, W))
    valid_ratio = jax.random.uniform(kv, (B, 2), jnp.float32, 0.5, 1.0)

    params = (w1, b1, w2, b2)
    fwd = jax.jit(functools.partial(center_generation_forward,
                                    top_K=top_K, out_height=64, out_width=64,
                                    params=params))
    heatmap, refpoints = fwd(feature, mask, valid_ratio)
    jax.block_until_ready((heatmap, refpoints))

    assert heatmap.shape == (B, Cout, H, W)
    assert refpoints.shape == (B, top_K, 2)

    # Numerical check of the fused Pallas head + NMS against the XLA reference.
    heat_k, nms_k = jax.jit(lambda f, m: _pred_head_nms(f, m, *params))(feature, mask)
    heat_ref = _reference_head(feature, mask, params)
    nms_ref = _reference_nms(heat_k)          # NMS of the kernel's own heatmap -> exact
    heat_err = float(jnp.max(jnp.abs(heat_k - heat_ref)))
    nms_err = float(jnp.max(jnp.abs(nms_k.reshape(B, Cout, H, W) - nms_ref)))
    assert heat_err < 2e-3, f"heatmap mismatch vs reference: {heat_err}"
    assert nms_err < 1e-6, f"nms mismatch vs reference: {nms_err}"

    print("KERNEL_OK")
</pallas_src>

<mosaic_0001>
module attributes {stable_mosaic.version = 11 : i64} {
  func.func @_center_head_kernel(%arg0: i32, %arg1: memref<8x512xf32, #tpu.memory_space<vmem>>, %arg2: memref<1x512xf32, #tpu.memory_space<vmem>>, %arg3: memref<8x73xf32, #tpu.memory_space<vmem>>, %arg4: memref<2x9xf32, #tpu.memory_space<vmem>>, %arg5: memref<4x512xf32, #tpu.memory_space<vmem>>) attributes {dimension_semantics = [#tpu.dimension_semantics<arbitrary>], iteration_bounds = array<i64: 1>, scalar_prefetch = 0 : i64, scratch_operands = 0 : i64, tpu.core_type = #tpu.core_type<tc>, window_params = [{pipeline_mode = #tpu.pipeline_mode<synchronous>, transform_indices = @transform_0, window_bounds = array<i64: 8, 512>}, {pipeline_mode = #tpu.pipeline_mode<synchronous>, transform_indices = @transform_1, window_bounds = array<i64: 1, 512>}, {pipeline_mode = #tpu.pipeline_mode<synchronous>, transform_indices = @transform_2, window_bounds = array<i64: 8, 73>}, {pipeline_mode = #tpu.pipeline_mode<synchronous>, transform_indices = @transform_3, window_bounds = array<i64: 2, 9>}, {pipeline_mode = #tpu.pipeline_mode<synchronous>, transform_indices = @transform_4, window_bounds = array<i64: 4, 512>}]} {
    %0 = tpu.iota {dimensions = array<i32: 1>} : vector<1x512xi32>
    %c15_i32 = arith.constant 15 : i32
    %1 = vector.broadcast %c15_i32 : i32 to vector<1x512xi32>
    %2 = arith.andi %0, %1 : vector<1x512xi32>
    %c4_i32 = arith.constant 4 : i32
    %3 = vector.broadcast %c4_i32 : i32 to vector<1x512xi32>
    %4 = arith.shrsi %0, %3 : vector<1x512xi32>
    %c15_i32_0 = arith.constant 15 : i32
    %5 = vector.broadcast %c15_i32_0 : i32 to vector<1x512xi32>
    %6 = arith.andi %4, %5 : vector<1x512xi32>
    %c0_i32 = arith.constant 0 : i32
    %7 = vector.broadcast %c0_i32 : i32 to vector<1x512xi32>
    %8 = arith.cmpi ne, %2, %7 : vector<1x512xi32>
    %cst = arith.constant 1.000000e+00 : f32
    %cst_1 = arith.constant 0.000000e+00 : f32
    %9 = vector.broadcast %cst : f32 to vector<1x512xf32>
    %10 = vector.broadcast %cst_1 : f32 to vector<1x512xf32>
    %11 = arith.select %8, %9, %10 : vector<1x512xi1>, vector<1x512xf32>
    %c15_i32_2 = arith.constant 15 : i32
    %12 = vector.broadcast %c15_i32_2 : i32 to vector<1x512xi32>
    %13 = arith.cmpi ne, %2, %12 : vector<1x512xi32>
    %cst_3 = arith.constant 1.000000e+00 : f32
    %cst_4 = arith.constant 0.000000e+00 : f32
    %14 = vector.broadcast %cst_3 : f32 to vector<1x512xf32>
    %15 = vector.broadcast %cst_4 : f32 to vector<1x512xf32>
    %16 = arith.select %13, %14, %15 : vector<1x512xi1>, vector<1x512xf32>
    %c0_i32_5 = arith.constant 0 : i32
    %17 = vector.broadcast %c0_i32_5 : i32 to vector<1x512xi32>
    %18 = arith.cmpi ne, %6, %17 : vector<1x512xi32>
    %cst_6 = arith.constant 1.000000e+00 : f32
    %cst_7 = arith.constant 0.000000e+00 : f32
    %19 = vector.broadcast %cst_6 : f32 to vector<1x512xf32>
    %20 = vector.broadcast %cst_7 : f32 to vector<1x512xf32>
    %21 = arith.select %18, %19, %20 : vector<1x512xi1>, vector<1x512xf32>
    %c15_i32_8 = arith.constant 15 : i32
    %22 = vector.broadcast %c15_i32_8 : i32 to vector<1x512xi32>
    %23 = arith.cmpi ne, %6, %22 : vector<1x512xi32>
    %cst_9 = arith.constant 1.000000e+00 : f32
    %cst_10 = arith.constant 0.000000e+00 : f32
    %24 = vector.broadcast %cst_9 : f32 to vector<1x512xf32>
    %25 = vector.broadcast %cst_10 : f32 to vector<1x512xf32>
    %26 = arith.select %23, %24, %25 : vector<1x512xi1>, vector<1x512xf32>
    %c0 = arith.constant 0 : index
    %c0_11 = arith.constant 0 : index
    %27 = vector.load %arg1[%c0, %c0_11] : memref<8x512xf32, #tpu.memory_space<vmem>>, vector<8x512xf32>
    %28 = vector.broadcast %11 : vector<1x512xf32> to vector<8x512xf32>
    %29 = arith.mulf %27, %28 : vector<8x512xf32>
    %30 = vector.broadcast %16 : vector<1x512xf32> to vector<8x512xf32>
    %31 = arith.mulf %27, %30 : vector<8x512xf32>
    %c17_i32 = arith.constant 17 : i32
    %32 = tpu.dynamic_rotate %31 by %c17_i32 dim 1 : vector<8x512xf32>, i32 -> vector<8x512xf32>
    %33 = vector.broadcast %21 : vector<1x512xf32> to vector<8x512xf32>
    %34 = arith.mulf %32, %33 : vector<8x512xf32>
    %c16_i32 = arith.constant 16 : i32
    %35 = tpu.dynamic_rotate %27 by %c16_i32 dim 1 : vector<8x512xf32>, i32 -> vector<8x512xf32>
    %36 = vector.broadcast %21 : vector<1x512xf32> to vector<8x512xf32>
    %37 = arith.mulf %35, %36 : vector<8x512xf32>
    %c15_i32_12 = arith.constant 15 : i32
    %38 = tpu.dynamic_rotate %29 by %c15_i32_12 dim 1 : vector<8x512xf32>, i32 -> vector<8x512xf32>
    %39 = vector.broadcast %21 : vector<1x512xf32> to vector<8x512xf32>
    %40 = arith.mulf %38, %39 : vector<8x512xf32>
    %c1_i32 = arith.constant 1 : i32
    %41 = tpu.dynamic_rotate %31 by %c1_i32 dim 1 : vector<8x512xf32>, i32 -> vector<8x512xf32>
    %c511_i32 = arith.constant 511 : i32
    %42 = tpu.dynamic_rotate %29 by %c511_i32 dim 1 : vector<8x512xf32>, i32 -> vector<8x512xf32>
    %c497_i32 = arith.constant 497 : i32
    %43 = tpu.dynamic_rotate %31 by %c497_i32 dim 1 : vector<8x512xf32>, i32 -> vector<8x512xf32>
    %44 = vector.broadcast %26 : vector<1x512xf32> to vector<8x512xf32>
    %45 = arith.mulf %43, %44 : vector<8x512xf32>
    %c496_i32 = arith.constant 496 : i32
    %46 = tpu.dynamic_rotate %27 by %c496_i32 dim 1 : vector<8x512xf32>, i32 -> vector<8x512xf32>
    %47 = vector.broadcast %26 : vector<1x512xf32> to vector<8x512xf32>
    %48 = arith.mulf %46, %47 : vector<8x512xf32>
    %c495_i32 = arith.constant 495 : i32
    %49 = tpu.dynamic_rotate %29 by %c495_i32 dim 1 : vector<8x512xf32>, i32 -> vector<8x512xf32>
    %50 = vector.broadcast %26 : vector<1x512xf32> to vector<8x512xf32>
    %51 = arith.mulf %49, %50 : vector<8x512xf32>
    %cst_13 = arith.constant 1.000000e+00 : f32
    %52 = vector.broadcast %cst_13 : f32 to vector<1x512xf32>
    %53 = tpu.concatenate %34, %37, %40, %41, %27, %42, %45, %48, %51, %52 in 0 : vector<8x512xf32>, vector<8x512xf32>, vector<8x512xf32>, vector<8x512xf32>, vector<8x512xf32>, vector<8x512xf32>, vector<8x512xf32>, vector<8x512xf32>, vector<8x512xf32>, vector<1x512xf32> -> vector<73x512xf32>
    %c0_14 = arith.constant 0 : index
    %c0_15 = arith.constant 0 : index
    %54 = vector.load %arg3[%c0_14, %c0_15] : memref<8x73xf32, #tpu.memory_space<vmem>>, vector<8x73xf32>
    %cst_16 = arith.constant dense<0.000000e+00> : vector<8x512xf32>
    %55 = tpu.matmul %54, %53, %cst_16 {dimension_numbers = #tpu.dot_dimension_numbers<[1], [0], [0], [1], [0, 0, 1, 1], [], []>} : vector<8x73xf32>, vector<73x512xf32>, vector<8x512xf32> -> vector<8x512xf32>
    %cst_17 = arith.constant 0.000000e+00 : f32
    %56 = vector.broadcast %cst_17 : f32 to vector<8x512xf32>
    %57 = arith.maximumf %55, %56 : vector<8x512xf32>
    %c0_18 = arith.constant 0 : index
    %c0_19 = arith.constant 0 : index
    %58 = vector.load %arg4[%c0_18, %c0_19] : memref<2x9xf32, #tpu.memory_space<vmem>>, vector<2x9xf32>
    %59 = tpu.concatenate %57, %52 in 0 : vector<8x512xf32>, vector<1x512xf32> -> vector<9x512xf32>
    %cst_20 = arith.constant dense<0.000000e+00> : vector<2x512xf32>
    %60 = tpu.matmul %58, %59, %cst_20 {dimension_numbers = #tpu.dot_dimension_numbers<[1], [0], [0], [1], [0, 0, 1, 1], [], []>} : vector<2x9xf32>, vector<9x512xf32>, vector<2x512xf32> -> vector<2x512xf32>
    %cst_21 = arith.constant 5.000000e-01 : f32
    %61 = vector.broadcast %cst_21 : f32 to vector<2x512xf32>
    %62 = arith.mulf %61, %60 : vector<2x512xf32>
    %63 = math.tanh %62 : vector<2x512xf32>
    %cst_22 = arith.constant 5.000000e-01 : f32
    %64 = vector.broadcast %cst_22 : f32 to vector<2x512xf32>
    %65 = arith.mulf %64, %63 : vector<2x512xf32>
    %cst_23 = arith.constant 5.000000e-01 : f32
    %66 = vector.broadcast %cst_23 : f32 to vector<2x512xf32>
    %67 = arith.addf %65, %66 : vector<2x512xf32>
    %c0_24 = arith.constant 0 : index
    %c0_25 = arith.constant 0 : index
    %68 = vector.load %arg2[%c0_24, %c0_25] : memref<1x512xf32, #tpu.memory_space<vmem>>, vector<1x512xf32>
    %cst_26 = arith.constant 5.000000e-01 : f32
    %69 = vector.broadcast %cst_26 : f32 to vector<1x512xf32>
    %70 = arith.cmpf ogt, %68, %69 : vector<1x512xf32>
    %cst_27 = arith.constant 0.000000e+00 : f32
    %71 = vector.shape_cast %70 : vector<1x512xi1> to vector<1x512xi1>
    %72 = vector.broadcast %71 : vector<1x512xi1> to vector<2x512xi1>
    %73 = vector.broadcast %cst_27 : f32 to vector<2x512xf32>
    %74 = arith.select %72, %73, %67 : vector<2x512xi1>, vector<2x512xf32>
    %c1_i32_28 = arith.constant 1 : i32
    %75 = tpu.dynamic_rotate %74 by %c1_i32_28 dim 1 : vector<2x512xf32>, i32 -> vector<2x512xf32>
    %76 = vector.broadcast %11 : vector<1x512xf32> to vector<2x512xf32>
    %77 = arith.mulf %75, %76 : vector<2x512xf32>
    %c511_i32_29 = arith.constant 511 : i32
    %78 = tpu.dynamic_rotate %74 by %c511_i32_29 dim 1 : vector<2x512xf32>, i32 -> vector<2x512xf32>
    %79 = vector.broadcast %16 : vector<1x512xf32> to vector<2x512xf32>
    %80 = arith.mulf %78, %79 : vector<2x512xf32>
    %81 = arith.maximumf %77, %80 : vector<2x512xf32>
    %82 = arith.maximumf %74, %81 : vector<2x512xf32>
    %c16_i32_30 = arith.constant 16 : i32
    %83 = tpu.dynamic_rotate %82 by %c16_i32_30 dim 1 : vector<2x512xf32>, i32 -> vector<2x512xf32>
    %84 = vector.broadcast %21 : vector<1x512xf32> to vector<2x512xf32>
    %85 = arith.mulf %83, %84 : vector<2x512xf32>
    %c496_i32_31 = arith.constant 496 : i32
    %86 = tpu.dynamic_rotate %82 by %c496_i32_31 dim 1 : vector<2x512xf32>, i32 -> vector<2x512xf32>
    %87 = vector.broadcast %26 : vector<1x512xf32> to vector<2x512xf32>
    %88 = arith.mulf %86, %87 : vector<2x512xf32>
    %89 = arith.maximumf %85, %88 : vector<2x512xf32>
    %90 = arith.maximumf %82, %89 : vector<2x512xf32>
    %c0_32 = arith.constant 0 : index
    %c0_33 = arith.constant 0 : index
    %91 = vector.load %arg5[%c0_32, %c0_33] : memref<4x512xf32, #tpu.memory_space<vmem>>, vector<2x512xf32>
    tpu.vector_store %arg5[%c0_32, %c0_33], %74 {strides = array<i32>} : memref<4x512xf32, #tpu.memory_space<vmem>>, vector<2x512xf32>,
    %92 = arith.cmpf oeq, %90, %74 : vector<2x512xf32>
    %cst_34 = arith.constant 0.000000e+00 : f32
    %93 = vector.broadcast %cst_34 : f32 to vector<2x512xf32>
    %94 = arith.select %92, %74, %93 : vector<2x512xi1>, vector<2x512xf32>
    %c2 = arith.constant 2 : index
    %c0_35 = arith.constant 0 : index
    %95 = vector.load %arg5[%c2, %c0_35] : memref<4x512xf32, #tpu.memory_space<vmem>>, vector<2x512xf32>
    tpu.vector_store %arg5[%c2, %c0_35], %94 {strides = array<i32>} : memref<4x512xf32, #tpu.memory_space<vmem>>, vector<2x512xf32>,
    return
  }
  func.func @transform_0(%arg0: i32) -> (i32, i32) {
    %c0_i32 = arith.constant 0 : i32
    %c0_i32_0 = arith.constant 0 : i32
    %c0_i32_1 = arith.constant 0 : i32
    return %c0_i32, %c0_i32_0 : i32, i32
  }
  func.func @transform_1(%arg0: i32) -> (i32, i32) {
    %c0_i32 = arith.constant 0 : i32
    %c0_i32_0 = arith.constant 0 : i32
    %c0_i32_1 = arith.constant 0 : i32
    return %c0_i32, %c0_i32_0 : i32, i32
  }
  func.func @transform_2(%arg0: i32) -> (i32, i32) {
    %c0_i32 = arith.constant 0 : i32
    %c0_i32_0 = arith.constant 0 : i32
    %c0_i32_1 = arith.constant 0 : i32
    return %c0_i32, %c0_i32_0 : i32, i32
  }
  func.func @transform_3(%arg0: i32) -> (i32, i32) {
    %c0_i32 = arith.constant 0 : i32
    %c0_i32_0 = arith.constant 0 : i32
    %c0_i32_1 = arith.constant 0 : i32
    return %c0_i32, %c0_i32_0 : i32, i32
  }
  func.func @transform_4(%arg0: i32) -> (i32, i32) {
    %c0_i32 = arith.constant 0 : i32
    %c0_i32_0 = arith.constant 0 : i32
    %c0_i32_1 = arith.constant 0 : i32
    return %c0_i32, %c0_i32_0 : i32, i32
  }
}

</mosaic_0001>

<llo_original>
// kernel: center_generation_forward.1
$region0: #{center_generation_forward.1}
  #allocation0 [shape = 'u32[]', space=smem, size = 0x4, offset = 0x4, fixed_abs, tag = 'smem constant byte address 0x4 - core index']
  #allocation1 [shape = 'u32[144,128]{1,0:T(1,128)}', space=vmem, size = 0x12000, scoped, tag = 'internal scratch']
  %s0 = inlined_call_operand.vmem [shape: f32[8,512], index: 0, kind: input, shape index: {}]
  %s1 = inlined_call_operand.vmem [shape: f32[1,512], index: 1, kind: input, shape index: {}]
  %s2 = inlined_call_operand.vmem [shape: f32[8,73], index: 2, kind: input, shape index: {}]
  %s3 = inlined_call_operand.vmem [shape: f32[2,9], index: 3, kind: input, shape index: {}]
  %s4 = inlined_call_operand.vmem [shape: f32[4,512], index: 4, kind: output, shape index: {}]
  %s5 = sld [smem:[#allocation0]]
  $region26: #{center_generation_forward.1} parent=0
    _
  %s7 = ssub.s32 1, %s5
  %s8 = scalar_select 0, %s7, %s5
  // Predicated region
  $region2: #{center_generation_forward.1} parent=0 // pred_check
    _
  $region3: #{center_generation_forward.1} parent=0 // pred_check_branch
    %10 = sbr.rel (0) target = $region5
  $region4: #{center_generation_forward.1} parent=0 // pred_region
    _
  $region5: #{center_generation_forward.1} parent=0 // pred_fallthru
    _
  // Predicated region
  $region6: #{center_generation_forward.1} parent=0 // pred_check
    _
  $region7: #{center_generation_forward.1} parent=0 // pred_check_branch
    %12 = sbr.rel (0) target = $region9
  $region8: #{center_generation_forward.1} parent=0 // pred_region
    _
  $region9: #{center_generation_forward.1} parent=0 // pred_fallthru
    _
  // Predicated region
  $region10: #{center_generation_forward.1} parent=0 // pred_check
    _
  $region11: #{center_generation_forward.1} parent=0 // pred_check_branch
    %14 = sbr.rel (0) target = $region13
  $region12: #{center_generation_forward.1} parent=0 // pred_region
    _
  $region13: #{center_generation_forward.1} parent=0 // pred_fallthru
    _
  // Predicated region
  $region14: #{center_generation_forward.1} parent=0 // pred_check
    _
  $region15: #{center_generation_forward.1} parent=0 // pred_check_branch
    %16 = sbr.rel (0) target = $region17
  $region16: #{center_generation_forward.1} parent=0 // pred_region
    _
  $region17: #{center_generation_forward.1} parent=0 // pred_fallthru
    _
  %v17 = vlaneseq
  %v18 = vand.u32 %v17, 127
  %v19 = vadd.s32 %v18, 128
  %v20 = vadd.s32 %v18, 256
  %v21 = vadd.s32 %v18, 384
  %v22 = vand.u32 %v18, 15
  %v23 = vand.u32 %v19, 15
  %v24 = vand.u32 %v20, 15
  %v25 = vand.u32 %v21, 15
  %v26 = vshra.s32 %v18, 4
  %v27 = vshra.s32 %v19, 4
  %v28 = vshra.s32 %v20, 4
  %v29 = vshra.s32 %v21, 4
  %v30 = vand.u32 %v26, 15
  %v31 = vand.u32 %v27, 15
  %v32 = vand.u32 %v28, 15
  %v33 = vand.u32 %v29, 15
  %vm34 = vcmp.ne.s32.totalorder %v22, 0
  %vm35 = vcmp.ne.s32.totalorder %v23, 0
  %vm36 = vcmp.ne.s32.totalorder %v24, 0
  %vm37 = vcmp.ne.s32.totalorder %v25, 0
  %v38 = vsel %vm34, 1.0, 0.0
  %v39 = vsel %vm35, 1.0, 0.0
  %v40 = vsel %vm36, 1.0, 0.0
  %v41 = vsel %vm37, 1.0, 0.0
  %vm42 = vcmp.ne.s32.totalorder %v22, 15
  %vm43 = vcmp.ne.s32.totalorder %v23, 15
  %vm44 = vcmp.ne.s32.totalorder %v24, 15
  %vm45 = vcmp.ne.s32.totalorder %v25, 15
  %v46 = vsel %vm42, 1.0, 0.0
  %v47 = vsel %vm43, 1.0, 0.0
  %v48 = vsel %vm44, 1.0, 0.0
  %v49 = vsel %vm45, 1.0, 0.0
  %vm50 = vcmp.ne.s32.totalorder %v30, 0
  %vm51 = vcmp.ne.s32.totalorder %v31, 0
  %vm52 = vcmp.ne.s32.totalorder %v32, 0
  %vm53 = vcmp.ne.s32.totalorder %v33, 0
  %v54 = vsel %vm50, 1.0, 0.0
  %v55 = vsel %vm51, 1.0, 0.0
  %v56 = vsel %vm52, 1.0, 0.0
  %v57 = vsel %vm53, 1.0, 0.0
  %vm58 = vcmp.ne.s32.totalorder %v30, 15
  %vm59 = vcmp.ne.s32.totalorder %v31, 15
  %vm60 = vcmp.ne.s32.totalorder %v32, 15
  %vm61 = vcmp.ne.s32.totalorder %v33, 15
  %v62 = vsel %vm58, 1.0, 0.0
  %v63 = vsel %vm59, 1.0, 0.0
  %v64 = vsel %vm60, 1.0, 0.0
  %v65 = vsel %vm61, 1.0, 0.0
  %v66 = vld [vmem:[%s0] sm:$0xff]
  %v67 = vld [vmem:[%s0 + $0x8] sm:$0xff]
  %v68 = vld [vmem:[%s0 + $0x10] sm:$0xff]
  %v69 = vld [vmem:[%s0 + $0x18] sm:$0xff]
  %v70 = vmul.f32 %v66, %v38
  %v71 = vmul.f32 %v67, %v39
  %v72 = vmul.f32 %v68, %v40
  %v73 = vmul.f32 %v69, %v41
  %v74 = vmul.f32 %v66, %v46
  %v75 = vmul.f32 %v67, %v47
  %v76 = vmul.f32 %v68, %v48
  %v77 = vmul.f32 %v69, %v49
  %78 = vrot.lane.b32.xlu0 %v74, 17
  %v79 = vpop.permute.xlu0 %78
  %80 = vrot.lane.b32.xlu0 %v75, 17
  %v81 = vpop.permute.xlu0 %80
  %82 = vrot.lane.b32.xlu0 %v76, 17
  %v83 = vpop.permute.xlu0 %82
  %84 = vrot.lane.b32.xlu0 %v77, 17
  %v85 = vpop.permute.xlu0 %84
  %vm86 = vcmp.lt.s32.totalorder %v18, 17
  %v87 = vsel %vm86, %v83, %v85
  %v88 = vsel %vm86, %v81, %v83
  %v89 = vsel %vm86, %v79, %v81
  %v90 = vsel %vm86, %v85, %v79
  %v91 = vmul.f32 %v90, %v54
  %v92 = vmul.f32 %v89, %v55
  %v93 = vmul.f32 %v88, %v56
  %v94 = vmul.f32 %v87, %v57
  %95 = vrot.lane.b32.xlu0 %v66, 16
  %v96 = vpop.permute.xlu0 %95
  %97 = vrot.lane.b32.xlu0 %v67, 16
  %v98 = vpop.permute.xlu0 %97
  %99 = vrot.lane.b32.xlu0 %v68, 16
  %v100 = vpop.permute.xlu0 %99
  %101 = vrot.lane.b32.xlu0 %v69, 16
  %v102 = vpop.permute.xlu0 %101
  %vm103 = vcmp.lt.s32.totalorder %v18, 16
  %v104 = vsel %vm103, %v100, %v102
  %v105 = vsel %vm103, %v98, %v100
  %v106 = vsel %vm103, %v96, %v98
  %v107 = vsel %vm103, %v102, %v96
  %v108 = vmul.f32 %v107, %v54
  %v109 = vmul.f32 %v106, %v55
  %v110 = vmul.f32 %v105, %v56
  %v111 = vmul.f32 %v104, %v57
  %112 = vrot.lane.b32.xlu0 %v70, 15
  %v113 = vpop.permute.xlu0 %112
  %114 = vrot.lane.b32.xlu0 %v71, 15
  %v115 = vpop.permute.xlu0 %114
  %116 = vrot.lane.b32.xlu0 %v72, 15
  %v117 = vpop.permute.xlu0 %116
  %118 = vrot.lane.b32.xlu0 %v73, 15
  %v119 = vpop.permute.xlu0 %118
  %vm120 = vcmp.lt.s32.totalorder %v18, 15
  %v121 = vsel %vm120, %v117, %v119
  %v122 = vsel %vm120, %v115, %v117
  %v123 = vsel %vm120, %v113, %v115
  %v124 = vsel %vm120, %v119, %v113
  %v125 = vmul.f32 %v124, %v54
  %v126 = vmul.f32 %v123, %v55
  %v127 = vmul.f32 %v122, %v56
  %v128 = vmul.f32 %v121, %v57
  %129 = vrot.lane.b32.xlu0 %v74, 1
  %v130 = vpop.permute.xlu0 %129
  %131 = vrot.lane.b32.xlu0 %v75, 1
  %v132 = vpop.permute.xlu0 %131
  %133 = vrot.lane.b32.xlu0 %v76, 1
  %v134 = vpop.permute.xlu0 %133
  %135 = vrot.lane.b32.xlu0 %v77, 1
  %v136 = vpop.permute.xlu0 %135
  %vm137 = vcmp.lt.s32.totalorder %v18, 1
  %v138 = vsel %vm137, %v134, %v136
  %v139 = vsel %vm137, %v132, %v134
  %v140 = vsel %vm137, %v130, %v132
  %v141 = vsel %vm137, %v136, %v130
  %142 = vrot.lane.b32.xlu0 %v70, 127
  %v143 = vpop.permute.xlu0 %142
  %144 = vrot.lane.b32.xlu0 %v71, 127
  %v145 = vpop.permute.xlu0 %144
  %146 = vrot.lane.b32.xlu0 %v72, 127
  %v147 = vpop.permute.xlu0 %146
  %148 = vrot.lane.b32.xlu0 %v73, 127
  %v149 = vpop.permute.xlu0 %148
  %vm150 = vcmp.lt.s32.totalorder %v18, 127
  %v151 = vsel %vm150, %v147, %v149
  %v152 = vsel %vm150, %v145, %v147
  %v153 = vsel %vm150, %v143, %v145
  %v154 = vsel %vm150, %v149, %v143
  %155 = vrot.lane.b32.xlu0 %v74, 113
  %v156 = vpop.permute.xlu0 %155
  %157 = vrot.lane.b32.xlu0 %v75, 113
  %v158 = vpop.permute.xlu0 %157
  %159 = vrot.lane.b32.xlu0 %v76, 113
  %v160 = vpop.permute.xlu0 %159
  %161 = vrot.lane.b32.xlu0 %v77, 113
  %v162 = vpop.permute.xlu0 %161
  %vm163 = vcmp.lt.s32.totalorder %v18, 113
  %v164 = vsel %vm163, %v160, %v162
  %v165 = vsel %vm163, %v158, %v160
  %v166 = vsel %vm163, %v156, %v158
  %v167 = vsel %vm163, %v162, %v156
  %v168 = vmul.f32 %v166, %v62
  %v169 = vmul.f32 %v165, %v63
  %v170 = vmul.f32 %v164, %v64
  %v171 = vmul.f32 %v167, %v65
  %172 = vrot.lane.b32.xlu0 %v66, 112
  %v173 = vpop.permute.xlu0 %172
  %174 = vrot.lane.b32.xlu0 %v67, 112
  %v175 = vpop.permute.xlu0 %174
  %176 = vrot.lane.b32.xlu0 %v68, 112
  %v177 = vpop.permute.xlu0 %176
  %178 = vrot.lane.b32.xlu0 %v69, 112
  %v179 = vpop.permute.xlu0 %178
  %vm180 = vcmp.lt.s32.totalorder %v18, 112
  %v181 = vsel %vm180, %v177, %v179
  %v182 = vsel %vm180, %v175, %v177
  %v183 = vsel %vm180, %v173, %v175
  %v184 = vsel %vm180, %v179, %v173
  %v185 = vmul.f32 %v183, %v62
  %v186 = vmul.f32 %v182, %v63
  %v187 = vmul.f32 %v181, %v64
  %v188 = vmul.f32 %v184, %v65
  %189 = vrot.lane.b32.xlu0 %v70, 111
  %v190 = vpop.permute.xlu0 %189
  %191 = vrot.lane.b32.xlu0 %v71, 111
  %v192 = vpop.permute.xlu0 %191
  %193 = vrot.lane.b32.xlu0 %v72, 111
  %v194 = vpop.permute.xlu0 %193
  %195 = vrot.lane.b32.xlu0 %v73, 111
  %v196 = vpop.permute.xlu0 %195
  %vm197 = vcmp.lt.s32.totalorder %v18, 111
  %v198 = vsel %vm197, %v194, %v196
  %v199 = vsel %vm197, %v192, %v194
  %v200 = vsel %vm197, %v190, %v192
  %v201 = vsel %vm197, %v196, %v190
  %v202 = vmul.f32 %v200, %v62
  %v203 = vmul.f32 %v199, %v63
  %v204 = vmul.f32 %v198, %v64
  %v205 = vmul.f32 %v201, %v65
  %v206 = vld [vmem:[%s2] sm:$0xff]
  %vm207 = vcmask 596992
  %v209 = vsel %vm207, %v206, 0
  %vm211 = vcmask 1040384
  %v213 = vsel %vm211, 1.0, 0
  %215 = vmatprep.subr.mxu0 %v92
  %216 = vmatpush1.msra.mxu0 %v91
  %217 = vmatprep.subr.mxu0 %v109
  %218 = vmatpush1.msra.mxu0 %v108
  %219 = vmatprep.subr.mxu0 %v126
  %220 = vmatpush1.msra.mxu0 %v125
  %221 = vmatprep.subr.mxu0 %v140
  %222 = vmatpush1.msra.mxu0 %v141
  %223 = vmatprep.subr.mxu0 %v67
  %224 = vmatpush1.msra.mxu0 %v66
  %225 = vmatprep.subr.mxu0 %v152
  %226 = vmatpush1.msra.mxu0 %v153
  %227 = vmatprep.subr.mxu0 %v169
  %228 = vmatpush1.msra.mxu0 %v168
  %229 = vmatprep.subr.mxu0 %v186
  %230 = vmatpush1.msra.mxu0 %v185
  %231 = vmatprep.subr.mxu0 %v203
  %232 = vmatpush1.msra.mxu0 %v202
  %233 = vmatprep.subr.mxu0 %v213
  %234 = vmatpush1.msra.mxu0 %v213
  %235 = vmatprep.subr.mxu0 0.0
  %236 = vmatpush1.msra.mxu0 0.0
  %237 = vmatprep.subr.mxu0 0.0
  %238 = vmatpush1.msra.mxu0 0.0
  %239 = vmatprep.subr.mxu0 0.0
  %240 = vmatpush1.msra.mxu0 0.0
  %241 = vmatprep.subr.mxu0 0.0
  %242 = vmatpush1.msra.mxu0 0.0
  %243 = vmatprep.subr.mxu0 0.0
  %244 = vmatpush1.msra.mxu0 0.0
  %245 = vmatprep.subr.mxu0 0.0
  %246 = vmatpush1.msra.mxu0 0.0
  %247 = vmatprep.subr.mxu0 0.0
  %248 = vmatpush1.msra.mxu0 0.0
  %249 = vmatprep.subr.mxu0 0.0
  %250 = vmatpush1.msra.mxu0 0.0
  %251 = vmatprep.subr.mxu0 0.0
  %252 = vmatpush1.msra.mxu0 0.0
  %253 = vmatprep.subr.mxu0 0.0
  %254 = vmatpush1.msra.mxu0 0.0
  %255 = vmatprep.subr.mxu0 0.0
  %256 = vmatpush1.msra.mxu0 0.0
  %257 = vmatprep.subr.mxu0 0.0
  %258 = vmatpush1.msra.mxu0 0.0
  %259 = vmatprep.subr.mxu0 0.0
  %260 = vmatpush1.msra.mxu0 0.0
  %261 = vmatprep.subr.mxu0 0.0
  %262 = vmatpush1.msra.mxu0 0.0
  %263 = vmatprep.subr.mxu0 0.0
  %264 = vmatpush1.msra.mxu0 0.0
  %265 = vmatprep.subr.mxu0 0.0
  %266 = vmatpush1.msra.mxu0 0.0
  %267 = vmatprep.subr.mxu0 0.0
  %268 = vmatpush1.msra.mxu0 0.0
  %269 = vmatprep.subr.mxu0 0.0
  %270 = vmatpush1.msra.mxu0 0.0
  %271 = vmatprep.subr.mxu0 0.0
  %272 = vmatpush1.msra.mxu0 0.0
  %273 = vmatprep.subr.mxu0 0.0
  %274 = vmatpush1.msra.mxu0 0.0
  %275 = vmatprep.subr.mxu0 0.0
  %276 = vmatpush1.msra.mxu0 0.0
  %277 = vmatprep.subr.mxu0 0.0
  %278 = vmatpush1.msra.mxu0 0.0
  %279 = vmatprep.mubr.f32.mxu0 0.0
  %280 = vmatmul.mubr.f32.gmra.mrb[0].mxu0 %v209
  %v281 = vpop.f32.mrb[0].mxu0
  %v282 = vadd.f32 0.0, %v281
  %v283 = vpop.f32.mrb[0].mxu0
  %v284 = vadd.f32 0.0, %v283
  %285 = vdwg.mxu0
  %286 = vmatprep.subr.mxu0 %v94
  %287 = vmatpush1.msra.mxu0 %v93
  %288 = vmatprep.subr.mxu0 %v111
  %289 = vmatpush1.msra.mxu0 %v110
  %290 = vmatprep.subr.mxu0 %v128
  %291 = vmatpush1.msra.mxu0 %v127
  %292 = vmatprep.subr.mxu0 %v138
  %293 = vmatpush1.msra.mxu0 %v139
  %294 = vmatprep.subr.mxu0 %v69
  %295 = vmatpush1.msra.mxu0 %v68
  %296 = vmatprep.subr.mxu0 %v154
  %297 = vmatpush1.msra.mxu0 %v151
  %298 = vmatprep.subr.mxu0 %v171
  %299 = vmatpush1.msra.mxu0 %v170
  %300 = vmatprep.subr.mxu0 %v188
  %301 = vmatpush1.msra.mxu0 %v187
  %302 = vmatprep.subr.mxu0 %v205
  %303 = vmatpush1.msra.mxu0 %v204
  %304 = vmatprep.subr.mxu0 %v213
  %305 = vmatpush1.msra.mxu0 %v213
  %306 = vmatprep.subr.mxu0 0.0
  %307 = vmatpush1.msra.mxu0 0.0
  %308 = vmatprep.subr.mxu0 0.0
  %309 = vmatpush1.msra.mxu0 0.0
  %310 = vmatprep.subr.mxu0 0.0
  %311 = vmatpush1.msra.mxu0 0.0
  %312 = vmatprep.subr.mxu0 0.0
  %313 = vmatpush1.msra.mxu0 0.0
  %314 = vmatprep.subr.mxu0 0.0
  %315 = vmatpush1.msra.mxu0 0.0
  %316 = vmatprep.subr.mxu0 0.0
  %317 = vmatpush1.msra.mxu0 0.0
  %318 = vmatprep.subr.mxu0 0.0
  %319 = vmatpush1.msra.mxu0 0.0
  %320 = vmatprep.subr.mxu0 0.0
  %321 = vmatpush1.msra.mxu0 0.0
  %322 = vmatprep.subr.mxu0 0.0
  %323 = vmatpush1.msra.mxu0 0.0
  %324 = vmatprep.subr.mxu0 0.0
  %325 = vmatpush1.msra.mxu0 0.0
  %326 = vmatprep.subr.mxu0 0.0
  %327 = vmatpush1.msra.mxu0 0.0
  %328 = vmatprep.subr.mxu0 0.0
  %329 = vmatpush1.msra.mxu0 0.0
  %330 = vmatprep.subr.mxu0 0.0
  %331 = vmatpush1.msra.mxu0 0.0
  %332 = vmatprep.subr.mxu0 0.0
  %333 = vmatpush1.msra.mxu0 0.0
  %334 = vmatprep.subr.mxu0 0.0
  %335 = vmatpush1.msra.mxu0 0.0
  %336 = vmatprep.subr.mxu0 0.0
  %337 = vmatpush1.msra.mxu0 0.0
  %338 = vmatprep.subr.mxu0 0.0
  %339 = vmatpush1.msra.mxu0 0.0
  %340 = vmatprep.subr.mxu0 0.0
  %341 = vmatpush1.msra.mxu0 0.0
  %342 = vmatprep.subr.mxu0 0.0
  %343 = vmatpush1.msra.mxu0 0.0
  %344 = vmatprep.subr.mxu0 0.0
  %345 = vmatpush1.msra.mxu0 0.0
  %346 = vmatprep.subr.mxu0 0.0
  %347 = vmatpush1.msra.mxu0 0.0
  %348 = vmatprep.subr.mxu0 0.0
  %349 = vmatpush1.msra.mxu0 0.0
  %350 = vmatprep.mubr.f32.mxu0 0.0
  %351 = vmatmul.mubr.f32.gmra.mrb[0].mxu0 %v209
  %v352 = vpop.f32.mrb[0].mxu0
  %v353 = vadd.f32 0.0, %v352
  %v354 = vpop.f32.mrb[0].mxu0
  %v355 = vadd.f32 0.0, %v354
  %356 = vdwg.mxu0
  %v357 = vmax.f32 %v282, 0.0
  %v358 = vmax.f32 %v284, 0.0
  %v359 = vmax.f32 %v353, 0.0
  %v360 = vmax.f32 %v355, 0.0
  %v361 = vld [vmem:[%s3] sm:$0x3]
  %vm362 = vcmask 72704
  %v364 = vsel %vm362, %v361, 0
  %366 = vmatprep.subr.mxu0 %v358
  %367 = vmatpush1.msra.mxu0 %v357
  %368 = vmatprep.subr.mxu0 %v213
  %369 = vmatpush1.msra.mxu0 %v213
  %370 = vmatprep.subr.mxu0 0.0
  %371 = vmatpush1.msra.mxu0 0.0
  %372 = vmatprep.subr.mxu0 0.0
  %373 = vmatpush1.msra.mxu0 0.0
  %374 = vmatprep.subr.mxu0 0.0
  %375 = vmatpush1.msra.mxu0 0.0
  %376 = vmatprep.subr.mxu0 0.0
  %377 = vmatpush1.msra.mxu0 0.0
  %378 = vmatprep.subr.mxu0 0.0
  %379 = vmatpush1.msra.mxu0 0.0
  %380 = vmatprep.subr.mxu0 0.0
  %381 = vmatpush1.msra.mxu0 0.0
  %382 = vmatprep.subr.mxu0 0.0
  %383 = vmatpush1.msra.mxu0 0.0
  %384 = vmatprep.subr.mxu0 0.0
  %385 = vmatpush1.msra.mxu0 0.0
  %386 = vmatprep.subr.mxu0 0.0
  %387 = vmatpush1.msra.mxu0 0.0
  %388 = vmatprep.subr.mxu0 0.0
  %389 = vmatpush1.msra.mxu0 0.0
  %390 = vmatprep.subr.mxu0 0.0
  %391 = vmatpush1.msra.mxu0 0.0
  %392 = vmatprep.subr.mxu0 0.0
  %393 = vmatpush1.msra.mxu0 0.0
  %394 = vmatprep.subr.mxu0 0.0
  %395 = vmatpush1.msra.mxu0 0.0
  %396 = vmatprep.subr.mxu0 0.0
  %397 = vmatpush1.msra.mxu0 0.0
  %398 = vmatprep.subr.mxu0 0.0
  %399 = vmatpush1.msra.mxu0 0.0
  %400 = vmatprep.subr.mxu0 0.0
  %401 = vmatpush1.msra.mxu0 0.0
  %402 = vmatprep.subr.mxu0 0.0
  %403 = vmatpush1.msra.mxu0 0.0
  %404 = vmatprep.subr.mxu0 0.0
  %405 = vmatpush1.msra.mxu0 0.0
  %406 = vmatprep.subr.mxu0 0.0
  %407 = vmatpush1.msra.mxu0 0.0
  %408 = vmatprep.subr.mxu0 0.0
  %409 = vmatpush1.msra.mxu0 0.0
  %410 = vmatprep.subr.mxu0 0.0
  %411 = vmatpush1.msra.mxu0 0.0
  %412 = vmatprep.subr.mxu0 0.0
  %413 = vmatpush1.msra.mxu0 0.0
  %414 = vmatprep.subr.mxu0 0.0
  %415 = vmatpush1.msra.mxu0 0.0
  %416 = vmatprep.subr.mxu0 0.0
  %417 = vmatpush1.msra.mxu0 0.0
  %418 = vmatprep.subr.mxu0 0.0
  %419 = vmatpush1.msra.mxu0 0.0
  %420 = vmatprep.subr.mxu0 0.0
  %421 = vmatpush1.msra.mxu0 0.0
  %422 = vmatprep.subr.mxu0 0.0
  %423 = vmatpush1.msra.mxu0 0.0
  %424 = vmatprep.subr.mxu0 0.0
  %425 = vmatpush1.msra.mxu0 0.0
  %426 = vmatprep.subr.mxu0 0.0
  %427 = vmatpush1.msra.mxu0 0.0
  %428 = vmatprep.subr.mxu0 0.0
  %429 = vmatpush1.msra.mxu0 0.0
  %430 = vmatprep.mubr.f32.mxu0 0.0
  %431 = vmatmul.mubr.f32.gmra.mrb[0].mxu0 %v364
  %v432 = vpop.f32.mrb[0].mxu0
  %v433 = vadd.f32 0.0, %v432
  %v434 = vpop.f32.mrb[0].mxu0
  %v435 = vadd.f32 0.0, %v434
  %436 = vdwg.mxu0
  %437 = vmatprep.subr.mxu0 %v360
  %438 = vmatpush1.msra.mxu0 %v359
  %439 = vmatprep.subr.mxu0 %v213
  %440 = vmatpush1.msra.mxu0 %v213
  %441 = vmatprep.subr.mxu0 0.0
  %442 = vmatpush1.msra.mxu0 0.0
  %443 = vmatprep.subr.mxu0 0.0
  %444 = vmatpush1.msra.mxu0 0.0
  %445 = vmatprep.subr.mxu0 0.0
  %446 = vmatpush1.msra.mxu0 0.0
  %447 = vmatprep.subr.mxu0 0.0
  %448 = vmatpush1.msra.mxu0 0.0
  %449 = vmatprep.subr.mxu0 0.0
  %450 = vmatpush1.msra.mxu0 0.0
  %451 = vmatprep.subr.mxu0 0.0
  %452 = vmatpush1.msra.mxu0 0.0
  %453 = vmatprep.subr.mxu0 0.0
  %454 = vmatpush1.msra.mxu0 0.0
  %455 = vmatprep.subr.mxu0 0.0
  %456 = vmatpush1.msra.mxu0 0.0
  %457 = vmatprep.subr.mxu0 0.0
  %458 = vmatpush1.msra.mxu0 0.0
  %459 = vmatprep.subr.mxu0 0.0
  %460 = vmatpush1.msra.mxu0 0.0
  %461 = vmatprep.subr.mxu0 0.0
  %462 = vmatpush1.msra.mxu0 0.0
  %463 = vmatprep.subr.mxu0 0.0
  %464 = vmatpush1.msra.mxu0 0.0
  %465 = vmatprep.subr.mxu0 0.0
  %466 = vmatpush1.msra.mxu0 0.0
  %467 = vmatprep.subr.mxu0 0.0
  %468 = vmatpush1.msra.mxu0 0.0
  %469 = vmatprep.subr.mxu0 0.0
  %470 = vmatpush1.msra.mxu0 0.0
  %471 = vmatprep.subr.mxu0 0.0
  %472 = vmatpush1.msra.mxu0 0.0
  %473 = vmatprep.subr.mxu0 0.0
  %474 = vmatpush1.msra.mxu0 0.0
  %475 = vmatprep.subr.mxu0 0.0
  %476 = vmatpush1.msra.mxu0 0.0
  %477 = vmatprep.subr.mxu0 0.0
  %478 = vmatpush1.msra.mxu0 0.0
  %479 = vmatprep.subr.mxu0 0.0
  %480 = vmatpush1.msra.mxu0 0.0
  %481 = vmatprep.subr.mxu0 0.0
  %482 = vmatpush1.msra.mxu0 0.0
  %483 = vmatprep.subr.mxu0 0.0
  %484 = vmatpush1.msra.mxu0 0.0
  %485 = vmatprep.subr.mxu0 0.0
  %486 = vmatpush1.msra.mxu0 0.0
  %487 = vmatprep.subr.mxu0 0.0
  %488 = vmatpush1.msra.mxu0 0.0
  %489 = vmatprep.subr.mxu0 0.0
  %490 = vmatpush1.msra.mxu0 0.0
  %491 = vmatprep.subr.mxu0 0.0
  %492 = vmatpush1.msra.mxu0 0.0
  %493 = vmatprep.subr.mxu0 0.0
  %494 = vmatpush1.msra.mxu0 0.0
  %495 = vmatprep.subr.mxu0 0.0
  %496 = vmatpush1.msra.mxu0 0.0
  %497 = vmatprep.subr.mxu0 0.0
  %498 = vmatpush1.msra.mxu0 0.0
  %499 = vmatprep.subr.mxu0 0.0
  %500 = vmatpush1.msra.mxu0 0.0
  %501 = vmatprep.mubr.f32.mxu0 0.0
  %502 = vmatmul.mubr.f32.gmra.mrb[0].mxu0 %v364
  %v503 = vpop.f32.mrb[0].mxu0
  %v504 = vadd.f32 0.0, %v503
  %v505 = vpop.f32.mrb[0].mxu0
  %v506 = vadd.f32 0.0, %v505
  %507 = vdwg.mxu0
  %v508 = vmul.f32 %v433, 0.5
  %v509 = vmul.f32 %v435, 0.5
  %v510 = vmul.f32 %v504, 0.5
  %v511 = vmul.f32 %v506, 0.5
  %v512 = vtanh.pop %v508
  %v513 = vtanh.pop %v509
  %v514 = vtanh.pop %v510
  %v515 = vtanh.pop %v511
  %v516 = vmul.f32 %v512, 0.5
  %v517 = vmul.f32 %v513, 0.5
  %v518 = vmul.f32 %v514, 0.5
  %v519 = vmul.f32 %v515, 0.5
  %v520 = vadd.f32 %v516, 0.5
  %v521 = vadd.f32 %v517, 0.5
  %v522 = vadd.f32 %v518, 0.5
  %v523 = vadd.f32 %v519, 0.5
  %v524 = vld [vmem:[%s1] sm:$0xf]
  %vm525 = vcmp.gt.f32.partialorder %v524, 0.5
  %v526 = vsel %vm525, 1, 0
  %v527 = vlaneseq
  %v528 = vshrl.u32 %v527, 7
  %v529 = vsub.s32 0, %v528
  %v530 = vrot.slane %v526, %v529
  %v531 = vlaneseq
  %v532 = vshrl.u32 %v531, 7
  %v533 = vsub.s32 1, %v532
  %v534 = vrot.slane %v526, %v533
  %v535 = vlaneseq
  %v536 = vshrl.u32 %v535, 7
  %v537 = vsub.s32 2, %v536
  %v538 = vrot.slane %v526, %v537
  %v539 = vlaneseq
  %v540 = vshrl.u32 %v539, 7
  %v541 = vsub.s32 3, %v540
  %v542 = vrot.slane %v526, %v541
  %vm543 = vcmp.eq.s32.totalorder %v530, 1
  %vm544 = vcmp.eq.s32.totalorder %v534, 1
  %vm545 = vcmp.eq.s32.totalorder %v538, 1
  %vm546 = vcmp.eq.s32.totalorder %v542, 1
  %v547 = vsel %vm543, 0.0, %v520
  %v548 = vsel %vm544, 0.0, %v521
  %v549 = vsel %vm545, 0.0, %v522
  %v550 = vsel %vm546, 0.0, %v523
  %551 = vrot.lane.b32.xlu0 %v547, 1
  %v552 = vpop.permute.xlu0 %551
  %553 = vrot.lane.b32.xlu0 %v548, 1
  %v554 = vpop.permute.xlu0 %553
  %555 = vrot.lane.b32.xlu0 %v549, 1
  %v556 = vpop.permute.xlu0 %555
  %557 = vrot.lane.b32.xlu0 %v550, 1
  %v558 = vpop.permute.xlu0 %557
  %v559 = vsel %vm137, %v556, %v558
  %v560 = vsel %vm137, %v554, %v556
  %v561 = vsel %vm137, %v552, %v554
  %v562 = vsel %vm137, %v558, %v552
  %v563 = vmul.f32 %v562, %v38
  %v564 = vmul.f32 %v561, %v39
  %v565 = vmul.f32 %v560, %v40
  %v566 = vmul.f32 %v559, %v41
  %567 = vrot.lane.b32.xlu0 %v547, 127
  %v568 = vpop.permute.xlu0 %567
  %569 = vrot.lane.b32.xlu0 %v548, 127
  %v570 = vpop.permute.xlu0 %569
  %571 = vrot.lane.b32.xlu0 %v549, 127
  %v572 = vpop.permute.xlu0 %571
  %573 = vrot.lane.b32.xlu0 %v550, 127
  %v574 = vpop.permute.xlu0 %573
  %v575 = vsel %vm150, %v572, %v574
  %v576 = vsel %vm150, %v570, %v572
  %v577 = vsel %vm150, %v568, %v570
  %v578 = vsel %vm150, %v574, %v568
  %v579 = vmul.f32 %v577, %v46
  %v580 = vmul.f32 %v576, %v47
  %v581 = vmul.f32 %v575, %v48
  %v582 = vmul.f32 %v578, %v49
  %v583 = vmax.f32 %v563, %v579
  %v584 = vmax.f32 %v564, %v580
  %v585 = vmax.f32 %v565, %v581
  %v586 = vmax.f32 %v566, %v582
  %v587 = vmax.f32 %v547, %v583
  %v588 = vmax.f32 %v548, %v584
  %v589 = vmax.f32 %v549, %v585
  %v590 = vmax.f32 %v550, %v586
  %591 = vrot.lane.b32.xlu0 %v587, 16
  %v592 = vpop.permute.xlu0 %591
  %593 = vrot.lane.b32.xlu0 %v588, 16
  %v594 = vpop.permute.xlu0 %593
  %595 = vrot.lane.b32.xlu0 %v589, 16
  %v596 = vpop.permute.xlu0 %595
  %597 = vrot.lane.b32.xlu0 %v590, 16
  %v598 = vpop.permute.xlu0 %597
  %v599 = vsel %vm103, %v596, %v598
  %v600 = vsel %vm103, %v594, %v596
  %v601 = vsel %vm103, %v592, %v594
  %v602 = vsel %vm103, %v598, %v592
  %v603 = vmul.f32 %v602, %v54
  %v604 = vmul.f32 %v601, %v55
  %v605 = vmul.f32 %v600, %v56
  %v606 = vmul.f32 %v599, %v57
  %607 = vrot.lane.b32.xlu0 %v587, 112
  %v608 = vpop.permute.xlu0 %607
  %609 = vrot.lane.b32.xlu0 %v588, 112
  %v610 = vpop.permute.xlu0 %609
  %611 = vrot.lane.b32.xlu0 %v589, 112
  %v612 = vpop.permute.xlu0 %611
  %613 = vrot.lane.b32.xlu0 %v590, 112
  %v614 = vpop.permute.xlu0 %613
  %v615 = vsel %vm180, %v612, %v614
  %v616 = vsel %vm180, %v610, %v612
  %v617 = vsel %vm180, %v608, %v610
  %v618 = vsel %vm180, %v614, %v608
  %v619 = vmul.f32 %v617, %v62
  %v620 = vmul.f32 %v616, %v63
  %v621 = vmul.f32 %v615, %v64
  %v622 = vmul.f32 %v618, %v65
  %v623 = vmax.f32 %v603, %v619
  %v624 = vmax.f32 %v604, %v620
  %v625 = vmax.f32 %v605, %v621
  %v626 = vmax.f32 %v606, %v622
  %v627 = vmax.f32 %v587, %v623
  %v628 = vmax.f32 %v588, %v624
  %v629 = vmax.f32 %v589, %v625
  %v630 = vmax.f32 %v590, %v626
  %v635 = vcombine.low %v547, %v548
  %v636 = vcombine.low %v549, %v550
  %639 = vst [vmem:[%s4] sm:$0x33] %v635
  %640 = vst [vmem:[%s4 + $0x8] sm:$0x33] %v636
  %vm641 = vcmp.eq.f32.partialorder %v627, %v547
  %vm642 = vcmp.eq.f32.partialorder %v628, %v548
  %vm643 = vcmp.eq.f32.partialorder %v629, %v549
  %vm644 = vcmp.eq.f32.partialorder %v630, %v550
  %v645 = vsel %vm641, %v547, 0.0
  %v646 = vsel %vm642, %v548, 0.0
  %v647 = vsel %vm643, %v549, 0.0
  %v648 = vsel %vm644, %v550, 0.0
  %v653 = vcombine.low %v645, %v646
  %v654 = vcombine.low %v647, %v648
  %v655 = vrot.slane %v653, 6
  %v656 = vrot.slane %v654, 6
  %659 = vst [vmem:[%s4] sm:$0xcc] %v655
  %660 = vst [vmem:[%s4 + $0x8] sm:$0xcc] %v656
  // Predicated region
  $region18: #{center_generation_forward.1} parent=0 // pred_check
    _
  $region19: #{center_generation_forward.1} parent=0 // pred_check_branch
    %662 = sbr.rel (0) target = $region21
  $region20: #{center_generation_forward.1} parent=0 // pred_region
    _
  $region21: #{center_generation_forward.1} parent=0 // pred_fallthru
    _
  // Predicated region
  $region22: #{center_generation_forward.1} parent=0 // pred_check
    _
  $region23: #{center_generation_forward.1} parent=0 // pred_check_branch
    %664 = sbr.rel (0) target = $region25
  $region24: #{center_generation_forward.1} parent=0 // pred_region
    _
  $region25: #{center_generation_forward.1} parent=0 // pred_fallthru
    _

</llo_original>
